<compile_context>
chip_gen: v6e
topology: v6e:2x2x1
jax: 0.10.0
libtpu: 0.0.40
codegen_flags: <defaults>
</compile_context>

<pallas_src>
import functools
import math

import jax
import jax.numpy as jnp
from jax.experimental import pallas as pl
from jax.experimental.pallas import tpu as pltpu

_EPS = 1e-5


def _seg_sum(a, s, *, split_lhs):
    """Per-token sums via MXU matmul against the 0/1 block-diagonal matrix `s`.

    DEFAULT precision (1 MXU pass).  When `split_lhs`, the lhs is split into two
    bf16-exact terms (hi + lo, 2 passes) so f32 inputs keep ~16 mantissa bits
    through the reduction (the rhs is 0/1, exact in bf16 either way)."""
    dot = functools.partial(jnp.dot, preferred_element_type=jnp.float32)
    if split_lhs:
        hi = a.astype(jnp.bfloat16).astype(jnp.float32)   # exactly representable in bf16
        lo = a - hi                                       # exact in f32 (Sterbenz)
        return dot(hi, s) + dot(lo, s)
    return dot(a, s)


def _ln_packed_kernel(x_ref, w_ref, s_ref, o_ref, *, inv_c, split_lhs):
    """Lane-dense path: `pack` tokens per 128-lane-multiple row; segment sums on MXU."""
    x_in = x_ref[...]                                       # (R, P), I/O dtype
    x = x_in.astype(jnp.float32)
    s = s_ref[...]                                          # (P, P) 0/1 block-diagonal
    mean = _seg_sum(x, s, split_lhs=split_lhs) * inv_c      # per-token mean, broadcast in-lane
    d = x - mean
    var = _seg_sum(d * d, s, split_lhs=split_lhs) * inv_c   # biased variance, two-pass
    scale = jax.lax.rsqrt(var + _EPS) * w_ref[...].astype(jnp.float32)
    if o_ref.dtype == jnp.bfloat16:
        # Widest elementwise op in bf16 (2x VPU rate on v6e/v7x); stats stay f32.
        o_ref[...] = x_in * scale.astype(jnp.bfloat16)
    else:
        o_ref[...] = (x * scale).astype(o_ref.dtype)


def _ln_rows_kernel(x_ref, w_ref, o_ref, *, inv_c):
    """Fallback path: one token per row, reduce directly over the last dim (XLU)."""
    x_in = x_ref[...]                                       # (R, C)
    x = x_in.astype(jnp.float32)
    mean = jnp.sum(x, axis=-1, keepdims=True) * inv_c
    d = x - mean
    var = jnp.sum(d * d, axis=-1, keepdims=True) * inv_c    # biased variance, two-pass
    scale = jax.lax.rsqrt(var + _EPS) * w_ref[...].astype(jnp.float32)
    if o_ref.dtype == jnp.bfloat16:
        o_ref[...] = x_in * scale.astype(jnp.bfloat16)
    else:
        o_ref[...] = (x * scale).astype(o_ref.dtype)


def _vmem_capacity_bytes():
    try:
        cap = int(getattr(pltpu.get_tpu_info(), "vmem_capacity_bytes", 0))
        if cap > 0:
            return cap
    except Exception:
        pass
    return 64 * 1024 * 1024                                 # conservative (v7x-sized) fallback


def _sublane(itemsize):
    # Native sublane packing: 8 rows for 32-bit, 16 for 16-bit, 32 for 8-bit.
    return {4: 8, 2: 16, 1: 32}.get(int(itemsize), 8)


def _choose_tile_rows(n_rows, row_elems, itemsize, f32_tmp_per_elem, vmem_budget_bytes):
    sub = _sublane(itemsize)
    # Per-row VMEM: 2x-in + 2x-out pipeline buffers (I/O dtype) + live f32 temporaries.
    bytes_per_row = row_elems * (4 * itemsize + 4 * f32_tmp_per_elem)
    t = max(sub, vmem_budget_bytes // max(1, bytes_per_row))
    # Prefer >= 8 grid steps (>= ~3-4 blocks per v7x TensorCore) as long as each
    # block still carries >= ~1 MiB of input (per-step overhead ~0.35 us).
    t_split = -(-n_rows // 8)
    if t_split * row_elems * itemsize >= (1 << 20):
        t = min(t, t_split)
    t = min(t, n_rows)
    if t < n_rows:
        t = max(sub, (t // sub) * sub)                      # sublane-aligned unless full extent
    return int(t)


def biasfree_layernorm(x, weight, *, block_rows=None):
    """x: (..., C); weight: (C,). Matches BiasFree_LayerNorm.forward."""
    orig_shape = x.shape
    C = int(orig_shape[-1])
    n_tokens = 1
    for s in orig_shape[:-1]:
        n_tokens *= int(s)
    x2d = x.reshape(n_tokens, C)
    itemsize = x2d.dtype.itemsize
    is_f32 = bool(x2d.dtype == jnp.float32)

    # Lane-dense packing: fold `pack` tokens into one row of P = pack*C lanes
    # (a multiple of 128) so loads/stores are unmasked and full-width.
    pack = 1 if C % 128 == 0 else 128 // math.gcd(C, 128)
    P = pack * C
    use_packed = pack > 1 and P <= 512                      # bound the (P, P) segment matrix

    if use_packed:
        rem = n_tokens % pack
        if rem:
            # Pad only the tail (< pack tokens) instead of dropping the whole
            # tensor to the masked-store fallback path.
            x2d = jnp.pad(x2d, ((0, pack - rem), (0, 0)))
        rows = x2d.shape[0] // pack
        xk = x2d.reshape(rows, P)                           # contiguous reshape: no HBM copy
        wk = jnp.tile(weight, pack).reshape(1, P)
        seg = jnp.arange(P, dtype=jnp.int32) // C
        smat = (seg[:, None] == seg[None, :]).astype(jnp.float32)    # (P, P)
        smat_bytes = P * P * 4
        f32_tmp = 10 if is_f32 else 7                       # hi/lo split needs more live temps
    else:
        rem = 0
        rows = n_tokens
        P = C
        xk = x2d
        wk = weight.reshape(1, C)
        smat = None
        smat_bytes = 0
        f32_tmp = 6

    # Generation-aware VMEM sizing: ~100 MiB limit on v5e/v6e (128 MiB VMEM),
    # ~56 MiB on v7x (64 MiB VMEM).
    vmem_cap = _vmem_capacity_bytes()
    vmem_limit = int(min(vmem_cap - (8 << 20), 100 * 1024 * 1024))
    budget = max(vmem_limit - 2 * smat_bytes - (4 << 20), 8 << 20)

    if block_rows is None:
        tile_rows = _choose_tile_rows(rows, P, itemsize, f32_tmp, budget)
    else:                                                   # test hook (forces ragged grids)
        sub = _sublane(itemsize)
        tile_rows = int(min(block_rows, rows))
        if tile_rows < rows:
            tile_rows = max(sub, (tile_rows // sub) * sub)

    grid = (pl.cdiv(rows, tile_rows),)                      # ragged last block: OOB rows masked on store

    x_spec = pl.BlockSpec((tile_rows, P), lambda i: (i, 0))
    w_spec = pl.BlockSpec((1, P), lambda i: (0, 0))
    o_spec = pl.BlockSpec((tile_rows, P), lambda i: (i, 0))

    compiler_params = pltpu.CompilerParams(
        dimension_semantics=("parallel",),                  # row axis shards across v7x's 2 TCs
        vmem_limit_bytes=vmem_limit,
    )

    if use_packed:
        kernel = functools.partial(_ln_packed_kernel, inv_c=1.0 / C, split_lhs=is_f32)
        in_specs = [x_spec, w_spec, pl.BlockSpec((P, P), lambda i: (0, 0))]
        operands = (xk, wk, smat)
    else:
        kernel = functools.partial(_ln_rows_kernel, inv_c=1.0 / C)
        in_specs = [x_spec, w_spec]
        operands = (xk, wk)

    out = pl.pallas_call(
        kernel,
        out_shape=jax.ShapeDtypeStruct((rows, P), x.dtype),
        grid_spec=pltpu.PrefetchScalarGridSpec(
            num_scalar_prefetch=0,
            grid=grid,
            in_specs=in_specs,
            out_specs=o_spec,
        ),
        compiler_params=compiler_params,
    )(*operands)

    if use_packed:
        out2d = out.reshape(rows * pack, C)
        if rem:
            out2d = out2d[:n_tokens]
        return out2d.reshape(orig_shape)
    return out.reshape(orig_shape)


def _reference(x, weight):
    # pure-JAX reference mirroring the PyTorch forward (biased variance, no mean subtraction)
    sigma = jnp.var(x, axis=-1, keepdims=True)
    return x / jnp.sqrt(sigma + 1e-5) * weight


def _check(x, w, name, atol=1e-4, rtol=1e-5, **kw):
    out = biasfree_layernorm(x, w, **kw)
    jax.block_until_ready(out)
    ref = _reference(x.astype(jnp.float32), w.astype(jnp.float32)).astype(x.dtype)
    assert out.shape == x.shape and out.dtype == x.dtype, name
    ok = jnp.allclose(out.astype(jnp.float32), ref.astype(jnp.float32), atol=atol, rtol=rtol)
    assert bool(ok), f"{name}: mismatch vs reference"


if __name__ == "__main__":
    key = jax.random.PRNGKey(0)
    k1, k2, k3, k4, k5, k6 = jax.random.split(key, 6)

    # 1) C=32 -> packed path (pack=4, P=128), f32, nonzero mean stresses the variance path.
    x1 = jax.random.normal(k1, (2, 64, 32), dtype=jnp.float32) + 3.0
    w1 = jnp.ones((32,), dtype=jnp.float32)
    _check(x1, w1, "packed C=32 f32")

    # 2) C=48 -> generalized packing via gcd (pack=8, P=384), token count divisible by pack.
    x2 = jax.random.normal(k2, (2, 40, 48), dtype=jnp.float32)
    w2 = 1.0 + 0.01 * jnp.arange(48, dtype=jnp.float32)
    _check(x2, w2, "packed C=48 f32")

    # 3) C=48 with token count NOT divisible by pack -> zero-padded tail rows, output sliced back.
    x3 = jax.random.normal(k3, (3, 7, 48), dtype=jnp.float32) - 1.5
    _check(x3, w2, "packed C=48 padded tail")

    # 4) Forced small block_rows -> multi-step grid with a ragged (partial) last block.
    x4 = jax.random.normal(k4, (2, 30, 64), dtype=jnp.float32) + 0.5
    w4 = 1.0 - 0.005 * jnp.arange(64, dtype=jnp.float32)
    _check(x4, w4, "packed C=64 ragged grid", block_rows=8)

    # 5) bf16 I/O -> packed path, DEFAULT-precision matmuls, bf16 final multiply.
    x5 = (jax.random.normal(k5, (2, 64, 32), dtype=jnp.float32) + 3.0).astype(jnp.bfloat16)
    w5 = jnp.ones((32,), dtype=jnp.bfloat16)
    _check(x5, w5, "packed C=32 bf16", atol=1e-1, rtol=2e-2)

    # 6) C=100 -> P would be 3200 (> 512): row-blocked fallback path.
    x6 = jax.random.normal(k6, (2, 10, 100), dtype=jnp.float32) * 2.0
    w6 = 1.0 + 0.002 * jnp.arange(100, dtype=jnp.float32)
    _check(x6, w6, "rows fallback C=100 f32")

    print("KERNEL_OK")
</pallas_src>

<mosaic_0001>
module attributes {stable_mosaic.version = 11 : i64} {
  func.func @_ln_packed_kernel(%arg0: i32, %arg1: memref<32x128xf32, #tpu.memory_space<vmem>>, %arg2: memref<1x128xf32, #tpu.memory_space<vmem>>, %arg3: memref<128x128xf32, #tpu.memory_space<vmem>>, %arg4: memref<32x128xf32, #tpu.memory_space<vmem>>) attributes {dimension_semantics = [#tpu.dimension_semantics<parallel>], iteration_bounds = array<i64: 1>, scalar_prefetch = 0 : i64, scratch_operands = 0 : i64, tpu.core_type = #tpu.core_type<tc>, window_params = [{transform_indices = @transform_0, window_bounds = array<i64: 32, 128>}, {pipeline_mode = #tpu.pipeline_mode<synchronous>, transform_indices = @transform_1, window_bounds = array<i64: 1, 128>}, {pipeline_mode = #tpu.pipeline_mode<synchronous>, transform_indices = @transform_2, window_bounds = array<i64: 128, 128>}, {transform_indices = @transform_3, window_bounds = array<i64: 32, 128>}]} {
    %c0 = arith.constant 0 : index
    %c0_0 = arith.constant 0 : index
    %0 = vector.load %arg1[%c0, %c0_0] : memref<32x128xf32, #tpu.memory_space<vmem>>, vector<32x128xf32>
    %c0_1 = arith.constant 0 : index
    %c0_2 = arith.constant 0 : index
    %1 = vector.load %arg3[%c0_1, %c0_2] : memref<128x128xf32, #tpu.memory_space<vmem>>, vector<128x128xf32>
    %2 = arith.truncf %0 : vector<32x128xf32> to vector<32x128xbf16>
    %3 = arith.extf %2 : vector<32x128xbf16> to vector<32x128xf32>
    %4 = arith.subf %0, %3 : vector<32x128xf32>
    %cst = arith.constant dense<0.000000e+00> : vector<32x128xf32>
    %5 = tpu.matmul %3, %1, %cst {dimension_numbers = #tpu.dot_dimension_numbers<[1], [0], [0], [1], [0, 0, 1, 1], [], []>} : vector<32x128xf32>, vector<128x128xf32>, vector<32x128xf32> -> vector<32x128xf32>
    %cst_3 = arith.constant dense<0.000000e+00> : vector<32x128xf32>
    %6 = tpu.matmul %4, %1, %cst_3 {dimension_numbers = #tpu.dot_dimension_numbers<[1], [0], [0], [1], [0, 0, 1, 1], [], []>} : vector<32x128xf32>, vector<128x128xf32>, vector<32x128xf32> -> vector<32x128xf32>
    %7 = arith.addf %5, %6 : vector<32x128xf32>
    %cst_4 = arith.constant 3.125000e-02 : f32
    %8 = vector.broadcast %cst_4 : f32 to vector<32x128xf32>
    %9 = arith.mulf %7, %8 : vector<32x128xf32>
    %10 = arith.subf %0, %9 : vector<32x128xf32>
    %11 = arith.mulf %10, %10 : vector<32x128xf32>
    %12 = arith.truncf %11 : vector<32x128xf32> to vector<32x128xbf16>
    %13 = arith.extf %12 : vector<32x128xbf16> to vector<32x128xf32>
    %14 = arith.subf %11, %13 : vector<32x128xf32>
    %cst_5 = arith.constant dense<0.000000e+00> : vector<32x128xf32>
    %15 = tpu.matmul %13, %1, %cst_5 {dimension_numbers = #tpu.dot_dimension_numbers<[1], [0], [0], [1], [0, 0, 1, 1], [], []>} : vector<32x128xf32>, vector<128x128xf32>, vector<32x128xf32> -> vector<32x128xf32>
    %cst_6 = arith.constant dense<0.000000e+00> : vector<32x128xf32>
    %16 = tpu.matmul %14, %1, %cst_6 {dimension_numbers = #tpu.dot_dimension_numbers<[1], [0], [0], [1], [0, 0, 1, 1], [], []>} : vector<32x128xf32>, vector<128x128xf32>, vector<32x128xf32> -> vector<32x128xf32>
    %17 = arith.addf %15, %16 : vector<32x128xf32>
    %cst_7 = arith.constant 3.125000e-02 : f32
    %18 = vector.broadcast %cst_7 : f32 to vector<32x128xf32>
    %19 = arith.mulf %17, %18 : vector<32x128xf32>
    %cst_8 = arith.constant 9.99999974E-6 : f32
    %20 = vector.broadcast %cst_8 : f32 to vector<32x128xf32>
    %21 = arith.addf %19, %20 : vector<32x128xf32>
    %22 = math.rsqrt %21 : vector<32x128xf32>
    %c0_9 = arith.constant 0 : index
    %c0_10 = arith.constant 0 : index
    %23 = vector.load %arg2[%c0_9, %c0_10] : memref<1x128xf32, #tpu.memory_space<vmem>>, vector<1x128xf32>
    %24 = vector.broadcast %23 : vector<1x128xf32> to vector<32x128xf32>
    %25 = arith.mulf %22, %24 : vector<32x128xf32>
    %26 = arith.mulf %0, %25 : vector<32x128xf32>
    %c0_11 = arith.constant 0 : index
    %c0_12 = arith.constant 0 : index
    %27 = vector.load %arg4[%c0_11, %c0_12] : memref<32x128xf32, #tpu.memory_space<vmem>>, vector<32x128xf32>
    tpu.vector_store %arg4[%c0_11, %c0_12], %26 {strides = array<i32>} : memref<32x128xf32, #tpu.memory_space<vmem>>, vector<32x128xf32>,
    return
  }
  func.func @transform_0(%arg0: i32) -> (i32, i32) {
    %c0_i32 = arith.constant 0 : i32
    %c0_i32_0 = arith.constant 0 : i32
    return %arg0, %c0_i32 : i32, i32
  }
  func.func @transform_1(%arg0: i32) -> (i32, i32) {
    %c0_i32 = arith.constant 0 : i32
    %c0_i32_0 = arith.constant 0 : i32
    %c0_i32_1 = arith.constant 0 : i32
    return %c0_i32, %c0_i32_0 : i32, i32
  }
  func.func @transform_2(%arg0: i32) -> (i32, i32) {
    %c0_i32 = arith.constant 0 : i32
    %c0_i32_0 = arith.constant 0 : i32
    %c0_i32_1 = arith.constant 0 : i32
    return %c0_i32, %c0_i32_0 : i32, i32
  }
  func.func @transform_3(%arg0: i32) -> (i32, i32) {
    %c0_i32 = arith.constant 0 : i32
    %c0_i32_0 = arith.constant 0 : i32
    return %arg0, %c0_i32 : i32, i32
  }
}

</mosaic_0001>

<llo_original>
// kernel: tpu_custom_call.1
$region0: #{tpu_custom_call.1}
  #allocation0 [shape = 'u32[]', space=smem, size = 0x4, offset = 0x4, fixed_abs, tag = 'smem constant byte address 0x4 - core index']
  #allocation1 [shape = 'u32[144,128]{1,0:T(1,128)}', space=vmem, size = 0x12000, scoped, tag = 'internal scratch']
  %s0 = inlined_call_operand.hbm [shape: f32[32,128], index: 0, kind: input, shape index: {}]
  %s1 = inlined_call_operand.vmem [shape: f32[1,128], index: 1, kind: input, shape index: {}]
  %s2 = inlined_call_operand.hbm [shape: f32[128,128], index: 2, kind: input, shape index: {}]
  %s3 = inlined_call_operand.hbm [shape: f32[32,128], index: 3, kind: output, shape index: {}]
  %s4 = sld [smem:[#allocation0]]
  $region30: #{tpu_custom_call.1} parent=0
    _
  %s6 = ssub.s32 1, %s4
  %s7 = scalar_select 0, %s6, %s4
  $region1: #{tpu_custom_call.1} parent=0
    #allocation2 [shape = 'u8[16384]{0}', space=vmem, size = 0x4000, scoped, tag = 'input window, operand 0, single buffered']
    #allocation3 [shape = 's32[1]{0}', space=sflag, size = 0x4, scoped, tag = 'scoped memory for tpu_custom_call.1']
    #allocation4 [shape = 's32[1]{0}', space=sflag, size = 0x4, scoped, tag = 'scoped memory for tpu_custom_call.1']
    #allocation5 [shape = 'u8[65536]{0}', space=vmem, size = 0x10000, scoped, tag = 'input window, operand 2, single buffered']
    #allocation6 [shape = 's32[1]{0}', space=sflag, size = 0x4, scoped, tag = 'scoped memory for tpu_custom_call.1']
    #allocation7 [shape = 'u8[16384]{0}', space=vmem, size = 0x4000, scoped, tag = 'output window, operand 0, single buffered']
    %8 = vsyncpa [#allocation3], 0
    %9 = vsyncpa [#allocation6], 0
    %10 = vsyncpa [#allocation4], 0
    // Predicated region
    $region2: #{tpu_custom_call.1} parent=1 // pred_check
      _
    $region3: #{tpu_custom_call.1} parent=1 // pred_check_branch
      %12 = sbr.rel (0) target = $region5
    $region4: #{tpu_custom_call.1} parent=1 // pred_region
      %s14 = ssub.s32 512, 512
      %15 = vsyncadd [#allocation3], %s14
      %s16 = sshll.u32 [#allocation2], 4
      %s17 = int_to_ptr.vmem [resolvable:$true] %s16
      %22 = dma.hbm_to_vmem [thread:$0]  %s0, 512, %s17, [#allocation3], 128, 128, 8
    $region5: #{tpu_custom_call.1} parent=1 // pred_fallthru
      _
    // Predicated region
    $region6: #{tpu_custom_call.1} parent=1 // pred_check
      _
    $region7: #{tpu_custom_call.1} parent=1 // pred_check_branch
      %24 = sbr.rel (0) target = $region9
    $region8: #{tpu_custom_call.1} parent=1 // pred_region
      _
    $region9: #{tpu_custom_call.1} parent=1 // pred_fallthru
      _
    // Predicated region
    $region10: #{tpu_custom_call.1} parent=1 // pred_check
      _
    $region11: #{tpu_custom_call.1} parent=1 // pred_check_branch
      %26 = sbr.rel (0) target = $region13
    $region12: #{tpu_custom_call.1} parent=1 // pred_region
      %s28 = ssub.s32 2048, 2048
      %29 = vsyncadd [#allocation6], %s28
      %s30 = sshll.u32 [#allocation5], 4
      %s31 = int_to_ptr.vmem [resolvable:$true] %s30
      %36 = dma.hbm_to_vmem [thread:$0]  %s2, 2048, %s31, [#allocation6], 128, 128, 8
    $region13: #{tpu_custom_call.1} parent=1 // pred_fallthru
      _
    // Predicated region
    $region14: #{tpu_custom_call.1} parent=1 // pred_check
      _
    $region15: #{tpu_custom_call.1} parent=1 // pred_check_branch
      %38 = sbr.rel (0) target = $region17
    $region16: #{tpu_custom_call.1} parent=1 // pred_region
      %39 = dma.done [#allocation3], 512
    $region17: #{tpu_custom_call.1} parent=1 // pred_fallthru
      _
    // Predicated region
    $region18: #{tpu_custom_call.1} parent=1 // pred_check
      _
    $region19: #{tpu_custom_call.1} parent=1 // pred_check_branch
      %41 = sbr.rel (0) target = $region21
    $region20: #{tpu_custom_call.1} parent=1 // pred_region
      %42 = dma.done [#allocation6], 2048
    $region21: #{tpu_custom_call.1} parent=1 // pred_fallthru
      _
    %v43 = vld [vmem:[#allocation2] sm:$0xff]
    %v44 = vld [vmem:[#allocation2 + $0x8] sm:$0xff]
    %v45 = vld [vmem:[#allocation2 + $0x10] sm:$0xff]
    %v46 = vld [vmem:[#allocation2 + $0x18] sm:$0xff]
    %v47 = vld [vmem:[#allocation5] sm:$0xff]
    %v48 = vld [vmem:[#allocation5 + $0x8] sm:$0xff]
    %v49 = vld [vmem:[#allocation5 + $0x10] sm:$0xff]
    %v50 = vld [vmem:[#allocation5 + $0x18] sm:$0xff]
    %v51 = vld [vmem:[#allocation5 + $0x20] sm:$0xff]
    %v52 = vld [vmem:[#allocation5 + $0x28] sm:$0xff]
    %v53 = vld [vmem:[#allocation5 + $0x30] sm:$0xff]
    %v54 = vld [vmem:[#allocation5 + $0x38] sm:$0xff]
    %v55 = vld [vmem:[#allocation5 + $0x40] sm:$0xff]
    %v56 = vld [vmem:[#allocation5 + $0x48] sm:$0xff]
    %v57 = vld [vmem:[#allocation5 + $0x50] sm:$0xff]
    %v58 = vld [vmem:[#allocation5 + $0x58] sm:$0xff]
    %v59 = vld [vmem:[#allocation5 + $0x60] sm:$0xff]
    %v60 = vld [vmem:[#allocation5 + $0x68] sm:$0xff]
    %v61 = vld [vmem:[#allocation5 + $0x70] sm:$0xff]
    %v62 = vld [vmem:[#allocation5 + $0x78] sm:$0xff]
    %v63 = vpack.c.bf16 %v44, %v43
    %v64 = vpack.c.bf16 %v46, %v45
    %v65 = vunpack.c.l.bf16 %v63
    %v66 = vunpack.c.h.bf16 %v63
    %v67 = vunpack.c.l.bf16 %v64
    %v68 = vunpack.c.h.bf16 %v64
    %v69 = vsub.f32 %v43, %v65
    %v70 = vsub.f32 %v44, %v66
    %v71 = vsub.f32 %v45, %v67
    %v72 = vsub.f32 %v46, %v68
    %73 = vmatprep.subr.mxu0 0.0
    %74 = vmatpush1.msra.mxu0 %v62
    %75 = vmatprep.subr.mxu0 0.0
    %76 = vmatpush1.msra.mxu0 %v61
    %77 = vmatprep.subr.mxu0 0.0
    %78 = vmatpush1.msra.mxu0 %v60
    %79 = vmatprep.subr.mxu0 0.0
    %80 = vmatpush1.msra.mxu0 %v59
    %81 = vmatprep.subr.mxu0 0.0
    %82 = vmatpush1.msra.mxu0 %v58
    %83 = vmatprep.subr.mxu0 0.0
    %84 = vmatpush1.msra.mxu0 %v57
    %85 = vmatprep.subr.mxu0 0.0
    %86 = vmatpush1.msra.mxu0 %v56
    %87 = vmatprep.subr.mxu0 0.0
    %88 = vmatpush1.msra.mxu0 %v55
    %89 = vmatprep.subr.mxu0 0.0
    %90 = vmatpush1.msra.mxu0 %v54
    %91 = vmatprep.subr.mxu0 0.0
    %92 = vmatpush1.msra.mxu0 %v53
    %93 = vmatprep.subr.mxu0 0.0
    %94 = vmatpush1.msra.mxu0 %v52
    %95 = vmatprep.subr.mxu0 0.0
    %96 = vmatpush1.msra.mxu0 %v51
    %97 = vmatprep.subr.mxu0 0.0
    %98 = vmatpush1.msra.mxu0 %v50
    %99 = vmatprep.subr.mxu0 0.0
    %100 = vmatpush1.msra.mxu0 %v49
    %101 = vmatprep.subr.mxu0 0.0
    %102 = vmatpush1.msra.mxu0 %v48
    %103 = vmatprep.subr.mxu0 0.0
    %104 = vmatpush1.msra.mxu0 %v47
    %105 = vmatprep.subr.mxu0 0.0
    %106 = vmatpush2.msra.mxu0 0.0
    %107 = vmatprep.subr.mxu0 0.0
    %108 = vmatpush2.msra.mxu0 0.0
    %109 = vmatprep.subr.mxu0 0.0
    %110 = vmatpush2.msra.mxu0 0.0
    %111 = vmatprep.subr.mxu0 0.0
    %112 = vmatpush2.msra.mxu0 0.0
    %113 = vmatprep.subr.mxu0 0.0
    %114 = vmatpush2.msra.mxu0 0.0
    %115 = vmatprep.subr.mxu0 0.0
    %116 = vmatpush2.msra.mxu0 0.0
    %117 = vmatprep.subr.mxu0 0.0
    %118 = vmatpush2.msra.mxu0 0.0
    %119 = vmatprep.subr.mxu0 0.0
    %120 = vmatpush2.msra.mxu0 0.0
    %121 = vmatprep.subr.mxu0 0.0
    %122 = vmatpush2.msra.mxu0 0.0
    %123 = vmatprep.subr.mxu0 0.0
    %124 = vmatpush2.msra.mxu0 0.0
    %125 = vmatprep.subr.mxu0 0.0
    %126 = vmatpush2.msra.mxu0 0.0
    %127 = vmatprep.subr.mxu0 0.0
    %128 = vmatpush2.msra.mxu0 0.0
    %129 = vmatprep.subr.mxu0 0.0
    %130 = vmatpush2.msra.mxu0 0.0
    %131 = vmatprep.subr.mxu0 0.0
    %132 = vmatpush2.msra.mxu0 0.0
    %133 = vmatprep.subr.mxu0 0.0
    %134 = vmatpush2.msra.mxu0 0.0
    %135 = vmatprep.subr.mxu0 0.0
    %136 = vmatpush2.msra.mxu0 0.0
    %137 = vmatprep.mubr.f32.mxu0 0.0
    %138 = vmatmul.mubr.f32.gmra.mxu0 %v69
    %v139 = vpop.f32.mrf.mxu0
    %v140 = vadd.f32 0.0, %v139
    %v141 = vpop.f32.mrf.mxu0
    %142 = vmatprep.mubr.f32.mxu0 0.0
    %143 = vmatmul.mubr.f32.gmra.mxu0 %v70
    %v144 = vpop.f32.mrf.mxu0
    %v145 = vadd.f32 0.0, %v144
    %v146 = vpop.f32.mrf.mxu0
    %147 = vmatprep.mubr.f32.mxu0 0.0
    %148 = vmatmul.mubr.f32.gmra.mxu0 %v71
    %v149 = vpop.f32.mrf.mxu0
    %v150 = vadd.f32 0.0, %v149
    %v151 = vpop.f32.mrf.mxu0
    %152 = vmatprep.mubr.f32.mxu0 0.0
    %153 = vmatmul.mubr.f32.gmra.mxu0 %v72
    %v154 = vpop.f32.mrf.mxu0
    %v155 = vadd.f32 0.0, %v154
    %v156 = vpop.f32.mrf.mxu0
    %157 = vdwg.mxu0
    %158 = vmatprep.subr.mxu0 0.0
    %159 = vmatpush1.msra.mxu0 %v62
    %160 = vmatprep.subr.mxu0 0.0
    %161 = vmatpush1.msra.mxu0 %v61
    %162 = vmatprep.subr.mxu0 0.0
    %163 = vmatpush1.msra.mxu0 %v60
    %164 = vmatprep.subr.mxu0 0.0
    %165 = vmatpush1.msra.mxu0 %v59
    %166 = vmatprep.subr.mxu0 0.0
    %167 = vmatpush1.msra.mxu0 %v58
    %168 = vmatprep.subr.mxu0 0.0
    %169 = vmatpush1.msra.mxu0 %v57
    %170 = vmatprep.subr.mxu0 0.0
    %171 = vmatpush1.msra.mxu0 %v56
    %172 = vmatprep.subr.mxu0 0.0
    %173 = vmatpush1.msra.mxu0 %v55
    %174 = vmatprep.subr.mxu0 0.0
    %175 = vmatpush1.msra.mxu0 %v54
    %176 = vmatprep.subr.mxu0 0.0
    %177 = vmatpush1.msra.mxu0 %v53
    %178 = vmatprep.subr.mxu0 0.0
    %179 = vmatpush1.msra.mxu0 %v52
    %180 = vmatprep.subr.mxu0 0.0
    %181 = vmatpush1.msra.mxu0 %v51
    %182 = vmatprep.subr.mxu0 0.0
    %183 = vmatpush1.msra.mxu0 %v50
    %184 = vmatprep.subr.mxu0 0.0
    %185 = vmatpush1.msra.mxu0 %v49
    %186 = vmatprep.subr.mxu0 0.0
    %187 = vmatpush1.msra.mxu0 %v48
    %188 = vmatprep.subr.mxu0 0.0
    %189 = vmatpush1.msra.mxu0 %v47
    %190 = vmatprep.subr.mxu0 0.0
    %191 = vmatpush2.msra.mxu0 0.0
    %192 = vmatprep.subr.mxu0 0.0
    %193 = vmatpush2.msra.mxu0 0.0
    %194 = vmatprep.subr.mxu0 0.0
    %195 = vmatpush2.msra.mxu0 0.0
    %196 = vmatprep.subr.mxu0 0.0
    %197 = vmatpush2.msra.mxu0 0.0
    %198 = vmatprep.subr.mxu0 0.0
    %199 = vmatpush2.msra.mxu0 0.0
    %200 = vmatprep.subr.mxu0 0.0
    %201 = vmatpush2.msra.mxu0 0.0
    %202 = vmatprep.subr.mxu0 0.0
    %203 = vmatpush2.msra.mxu0 0.0
    %204 = vmatprep.subr.mxu0 0.0
    %205 = vmatpush2.msra.mxu0 0.0
    %206 = vmatprep.subr.mxu0 0.0
    %207 = vmatpush2.msra.mxu0 0.0
    %208 = vmatprep.subr.mxu0 0.0
    %209 = vmatpush2.msra.mxu0 0.0
    %210 = vmatprep.subr.mxu0 0.0
    %211 = vmatpush2.msra.mxu0 0.0
    %212 = vmatprep.subr.mxu0 0.0
    %213 = vmatpush2.msra.mxu0 0.0
    %214 = vmatprep.subr.mxu0 0.0
    %215 = vmatpush2.msra.mxu0 0.0
    %216 = vmatprep.subr.mxu0 0.0
    %217 = vmatpush2.msra.mxu0 0.0
    %218 = vmatprep.subr.mxu0 0.0
    %219 = vmatpush2.msra.mxu0 0.0
    %220 = vmatprep.subr.mxu0 0.0
    %221 = vmatpush2.msra.mxu0 0.0
    %222 = vmatprep.mubr.f32.mxu0 0.0
    %223 = vmatmul.mubr.f32.gmra.mxu0 %v65
    %v224 = vpop.f32.mrf.mxu0
    %v225 = vadd.f32 %v140, %v224
    %v226 = vpop.f32.mrf.mxu0
    %227 = vmatprep.mubr.f32.mxu0 0.0
    %228 = vmatmul.mubr.f32.gmra.mxu0 %v66
    %v229 = vpop.f32.mrf.mxu0
    %v230 = vadd.f32 %v145, %v229
    %v231 = vpop.f32.mrf.mxu0
    %232 = vmatprep.mubr.f32.mxu0 0.0
    %233 = vmatmul.mubr.f32.gmra.mxu0 %v67
    %v234 = vpop.f32.mrf.mxu0
    %v235 = vadd.f32 %v150, %v234
    %v236 = vpop.f32.mrf.mxu0
    %237 = vmatprep.mubr.f32.mxu0 0.0
    %238 = vmatmul.mubr.f32.gmra.mxu0 %v68
    %v239 = vpop.f32.mrf.mxu0
    %v240 = vadd.f32 %v155, %v239
    %v241 = vpop.f32.mrf.mxu0
    %242 = vdwg.mxu0
    %v243 = vmul.f32 %v225, 0.03125
    %v244 = vmul.f32 %v230, 0.03125
    %v245 = vmul.f32 %v235, 0.03125
    %v246 = vmul.f32 %v240, 0.03125
    %v247 = vsub.f32 %v43, %v243
    %v248 = vsub.f32 %v44, %v244
    %v249 = vsub.f32 %v45, %v245
    %v250 = vsub.f32 %v46, %v246
    %v251 = vmul.f32 %v247, %v247
    %v252 = vmul.f32 %v248, %v248
    %v253 = vmul.f32 %v249, %v249
    %v254 = vmul.f32 %v250, %v250
    %v255 = vpack.c.bf16 %v252, %v251
    %v256 = vpack.c.bf16 %v254, %v253
    %v257 = vunpack.c.l.bf16 %v255
    %v258 = vunpack.c.h.bf16 %v255
    %v259 = vunpack.c.l.bf16 %v256
    %v260 = vunpack.c.h.bf16 %v256
    %v261 = vsub.f32 %v251, %v257
    %v262 = vsub.f32 %v252, %v258
    %v263 = vsub.f32 %v253, %v259
    %v264 = vsub.f32 %v254, %v260
    %265 = vmatprep.subr.mxu0 0.0
    %266 = vmatpush1.msra.mxu0 %v62
    %267 = vmatprep.subr.mxu0 0.0
    %268 = vmatpush1.msra.mxu0 %v61
    %269 = vmatprep.subr.mxu0 0.0
    %270 = vmatpush1.msra.mxu0 %v60
    %271 = vmatprep.subr.mxu0 0.0
    %272 = vmatpush1.msra.mxu0 %v59
    %273 = vmatprep.subr.mxu0 0.0
    %274 = vmatpush1.msra.mxu0 %v58
    %275 = vmatprep.subr.mxu0 0.0
    %276 = vmatpush1.msra.mxu0 %v57
    %277 = vmatprep.subr.mxu0 0.0
    %278 = vmatpush1.msra.mxu0 %v56
    %279 = vmatprep.subr.mxu0 0.0
    %280 = vmatpush1.msra.mxu0 %v55
    %281 = vmatprep.subr.mxu0 0.0
    %282 = vmatpush1.msra.mxu0 %v54
    %283 = vmatprep.subr.mxu0 0.0
    %284 = vmatpush1.msra.mxu0 %v53
    %285 = vmatprep.subr.mxu0 0.0
    %286 = vmatpush1.msra.mxu0 %v52
    %287 = vmatprep.subr.mxu0 0.0
    %288 = vmatpush1.msra.mxu0 %v51
    %289 = vmatprep.subr.mxu0 0.0
    %290 = vmatpush1.msra.mxu0 %v50
    %291 = vmatprep.subr.mxu0 0.0
    %292 = vmatpush1.msra.mxu0 %v49
    %293 = vmatprep.subr.mxu0 0.0
    %294 = vmatpush1.msra.mxu0 %v48
    %295 = vmatprep.subr.mxu0 0.0
    %296 = vmatpush1.msra.mxu0 %v47
    %297 = vmatprep.subr.mxu0 0.0
    %298 = vmatpush2.msra.mxu0 0.0
    %299 = vmatprep.subr.mxu0 0.0
    %300 = vmatpush2.msra.mxu0 0.0
    %301 = vmatprep.subr.mxu0 0.0
    %302 = vmatpush2.msra.mxu0 0.0
    %303 = vmatprep.subr.mxu0 0.0
    %304 = vmatpush2.msra.mxu0 0.0
    %305 = vmatprep.subr.mxu0 0.0
    %306 = vmatpush2.msra.mxu0 0.0
    %307 = vmatprep.subr.mxu0 0.0
    %308 = vmatpush2.msra.mxu0 0.0
    %309 = vmatprep.subr.mxu0 0.0
    %310 = vmatpush2.msra.mxu0 0.0
    %311 = vmatprep.subr.mxu0 0.0
    %312 = vmatpush2.msra.mxu0 0.0
    %313 = vmatprep.subr.mxu0 0.0
    %314 = vmatpush2.msra.mxu0 0.0
    %315 = vmatprep.subr.mxu0 0.0
    %316 = vmatpush2.msra.mxu0 0.0
    %317 = vmatprep.subr.mxu0 0.0
    %318 = vmatpush2.msra.mxu0 0.0
    %319 = vmatprep.subr.mxu0 0.0
    %320 = vmatpush2.msra.mxu0 0.0
    %321 = vmatprep.subr.mxu0 0.0
    %322 = vmatpush2.msra.mxu0 0.0
    %323 = vmatprep.subr.mxu0 0.0
    %324 = vmatpush2.msra.mxu0 0.0
    %325 = vmatprep.subr.mxu0 0.0
    %326 = vmatpush2.msra.mxu0 0.0
    %327 = vmatprep.subr.mxu0 0.0
    %328 = vmatpush2.msra.mxu0 0.0
    %329 = vmatprep.mubr.f32.mxu0 0.0
    %330 = vmatmul.mubr.f32.gmra.mxu0 %v261
    %v331 = vpop.f32.mrf.mxu0
    %v332 = vadd.f32 0.0, %v331
    %v333 = vpop.f32.mrf.mxu0
    %334 = vmatprep.mubr.f32.mxu0 0.0
    %335 = vmatmul.mubr.f32.gmra.mxu0 %v262
    %v336 = vpop.f32.mrf.mxu0
    %v337 = vadd.f32 0.0, %v336
    %v338 = vpop.f32.mrf.mxu0
    %339 = vmatprep.mubr.f32.mxu0 0.0
    %340 = vmatmul.mubr.f32.gmra.mxu0 %v263
    %v341 = vpop.f32.mrf.mxu0
    %v342 = vadd.f32 0.0, %v341
    %v343 = vpop.f32.mrf.mxu0
    %344 = vmatprep.mubr.f32.mxu0 0.0
    %345 = vmatmul.mubr.f32.gmra.mxu0 %v264
    %v346 = vpop.f32.mrf.mxu0
    %v347 = vadd.f32 0.0, %v346
    %v348 = vpop.f32.mrf.mxu0
    %349 = vdwg.mxu0
    %350 = vmatprep.subr.mxu0 0.0
    %351 = vmatpush1.msra.mxu0 %v62
    %352 = vmatprep.subr.mxu0 0.0
    %353 = vmatpush1.msra.mxu0 %v61
    %354 = vmatprep.subr.mxu0 0.0
    %355 = vmatpush1.msra.mxu0 %v60
    %356 = vmatprep.subr.mxu0 0.0
    %357 = vmatpush1.msra.mxu0 %v59
    %358 = vmatprep.subr.mxu0 0.0
    %359 = vmatpush1.msra.mxu0 %v58
    %360 = vmatprep.subr.mxu0 0.0
    %361 = vmatpush1.msra.mxu0 %v57
    %362 = vmatprep.subr.mxu0 0.0
    %363 = vmatpush1.msra.mxu0 %v56
    %364 = vmatprep.subr.mxu0 0.0
    %365 = vmatpush1.msra.mxu0 %v55
    %366 = vmatprep.subr.mxu0 0.0
    %367 = vmatpush1.msra.mxu0 %v54
    %368 = vmatprep.subr.mxu0 0.0
    %369 = vmatpush1.msra.mxu0 %v53
    %370 = vmatprep.subr.mxu0 0.0
    %371 = vmatpush1.msra.mxu0 %v52
    %372 = vmatprep.subr.mxu0 0.0
    %373 = vmatpush1.msra.mxu0 %v51
    %374 = vmatprep.subr.mxu0 0.0
    %375 = vmatpush1.msra.mxu0 %v50
    %376 = vmatprep.subr.mxu0 0.0
    %377 = vmatpush1.msra.mxu0 %v49
    %378 = vmatprep.subr.mxu0 0.0
    %379 = vmatpush1.msra.mxu0 %v48
    %380 = vmatprep.subr.mxu0 0.0
    %381 = vmatpush1.msra.mxu0 %v47
    %382 = vmatprep.subr.mxu0 0.0
    %383 = vmatpush2.msra.mxu0 0.0
    %384 = vmatprep.subr.mxu0 0.0
    %385 = vmatpush2.msra.mxu0 0.0
    %386 = vmatprep.subr.mxu0 0.0
    %387 = vmatpush2.msra.mxu0 0.0
    %388 = vmatprep.subr.mxu0 0.0
    %389 = vmatpush2.msra.mxu0 0.0
    %390 = vmatprep.subr.mxu0 0.0
    %391 = vmatpush2.msra.mxu0 0.0
    %392 = vmatprep.subr.mxu0 0.0
    %393 = vmatpush2.msra.mxu0 0.0
    %394 = vmatprep.subr.mxu0 0.0
    %395 = vmatpush2.msra.mxu0 0.0
    %396 = vmatprep.subr.mxu0 0.0
    %397 = vmatpush2.msra.mxu0 0.0
    %398 = vmatprep.subr.mxu0 0.0
    %399 = vmatpush2.msra.mxu0 0.0
    %400 = vmatprep.subr.mxu0 0.0
    %401 = vmatpush2.msra.mxu0 0.0
    %402 = vmatprep.subr.mxu0 0.0
    %403 = vmatpush2.msra.mxu0 0.0
    %404 = vmatprep.subr.mxu0 0.0
    %405 = vmatpush2.msra.mxu0 0.0
    %406 = vmatprep.subr.mxu0 0.0
    %407 = vmatpush2.msra.mxu0 0.0
    %408 = vmatprep.subr.mxu0 0.0
    %409 = vmatpush2.msra.mxu0 0.0
    %410 = vmatprep.subr.mxu0 0.0
    %411 = vmatpush2.msra.mxu0 0.0
    %412 = vmatprep.subr.mxu0 0.0
    %413 = vmatpush2.msra.mxu0 0.0
    %414 = vmatprep.mubr.f32.mxu0 0.0
    %415 = vmatmul.mubr.f32.gmra.mxu0 %v257
    %v416 = vpop.f32.mrf.mxu0
    %v417 = vadd.f32 %v332, %v416
    %v418 = vpop.f32.mrf.mxu0
    %419 = vmatprep.mubr.f32.mxu0 0.0
    %420 = vmatmul.mubr.f32.gmra.mxu0 %v258
    %v421 = vpop.f32.mrf.mxu0
    %v422 = vadd.f32 %v337, %v421
    %v423 = vpop.f32.mrf.mxu0
    %424 = vmatprep.mubr.f32.mxu0 0.0
    %425 = vmatmul.mubr.f32.gmra.mxu0 %v259
    %v426 = vpop.f32.mrf.mxu0
    %v427 = vadd.f32 %v342, %v426
    %v428 = vpop.f32.mrf.mxu0
    %429 = vmatprep.mubr.f32.mxu0 0.0
    %430 = vmatmul.mubr.f32.gmra.mxu0 %v260
    %v431 = vpop.f32.mrf.mxu0
    %v432 = vadd.f32 %v347, %v431
    %v433 = vpop.f32.mrf.mxu0
    %434 = vdwg.mxu0
    %v435 = vmul.f32 %v417, 0.03125
    %v436 = vmul.f32 %v422, 0.03125
    %v437 = vmul.f32 %v427, 0.03125
    %v438 = vmul.f32 %v432, 0.03125
    %v439 = vadd.f32 %v435, 1e-05
    %v440 = vadd.f32 %v436, 1e-05
    %v441 = vadd.f32 %v437, 1e-05
    %v442 = vadd.f32 %v438, 1e-05
    %v443 = vrsqrt.pop %v439
    %v444 = vrsqrt.pop %v440
    %v445 = vrsqrt.pop %v441
    %v446 = vrsqrt.pop %v442
    %v447 = vld [vmem:[%s1] sm:$0x1]
    %v449 = vlaneseq
    %v450 = vshrl.u32 %v449, 7
    %v451 = vsub.s32 0, %v450
    %v452 = vrot.slane %v447, %v451
    %v454 = vmul.f32 %v443, %v452
    %v455 = vmul.f32 %v444, %v452
    %v456 = vmul.f32 %v445, %v452
    %v457 = vmul.f32 %v446, %v452
    %v458 = vmul.f32 %v43, %v454
    %v459 = vmul.f32 %v44, %v455
    %v460 = vmul.f32 %v45, %v456
    %v461 = vmul.f32 %v46, %v457
    %462 = vst [vmem:[#allocation7] sm:$0xff] %v458
    %463 = vst [vmem:[#allocation7 + $0x8] sm:$0xff] %v459
    %464 = vst [vmem:[#allocation7 + $0x10] sm:$0xff] %v460
    %465 = vst [vmem:[#allocation7 + $0x18] sm:$0xff] %v461
    // Predicated region
    $region22: #{tpu_custom_call.1} parent=1 // pred_check
      _
    $region23: #{tpu_custom_call.1} parent=1 // pred_check_branch
      %467 = sbr.rel (0) target = $region25
    $region24: #{tpu_custom_call.1} parent=1 // pred_region
      %s469 = ssub.s32 512, 512
      %470 = vsyncadd [#allocation4], %s469
      %s471 = sshll.u32 [#allocation7], 4
      %s472 = int_to_ptr.vmem [resolvable:$true] %s471
      %477 = dma.vmem_to_hbm [thread:$0]  %s472, 512, %s3, [#allocation4], 128, 128, 8
    $region25: #{tpu_custom_call.1} parent=1 // pred_fallthru
      _
    // Predicated region
    $region26: #{tpu_custom_call.1} parent=1 // pred_check
      _
    $region27: #{tpu_custom_call.1} parent=1 // pred_check_branch
      %479 = sbr.rel (0) target = $region29
    $region28: #{tpu_custom_call.1} parent=1 // pred_region
      %480 = dma.done [#allocation4], 512
    $region29: #{tpu_custom_call.1} parent=1 // pred_fallthru
      _
    %481 = vsyncpa [#allocation3], 1
    %482 = vsyncpa [#allocation6], 1
    %483 = vsyncpa [#allocation4], 1

</llo_original>
